<compile_context>
chip_gen: v6e
topology: v6e:2x2x1
jax: 0.10.0
libtpu: 0.0.40
codegen_flags: <defaults>
</compile_context>

<pallas_src>
import functools

import jax
import jax.numpy as jnp
from jax import lax
from jax.experimental import pallas as pl
from jax.experimental.pallas import tpu as pltpu


# ----------------------------------------------------------------------------
# Chip-derived limits
# ----------------------------------------------------------------------------
def _derive_limits():
    cap = 128 * 1024 * 1024
    try:
        info = pltpu.get_tpu_info()
        for name in ("vmem_capacity_bytes", "vmem_bytes", "vmem_size_bytes"):
            v = getattr(info, name, None)
            if v:
                cap = int(v)
                break
    except Exception:
        pass
    if cap >= 100 * 1024 * 1024:            # v5e / v6e: 128 MiB VMEM
        return 1024, 64 * 1024 * 1024
    return 512, 40 * 1024 * 1024            # v7x: 64 MiB VMEM per TensorCore


_MAX_ROW_TILE, _VMEM_LIMIT = _derive_limits()


# ----------------------------------------------------------------------------
# Small helpers
# ----------------------------------------------------------------------------
def _round_up(n, m):
    return ((n + m - 1) // m) * m


def _pick_tile(n, max_tile=None):
    mt = max_tile or _MAX_ROW_TILE
    if n >= mt:
        return mt
    return _round_up(max(n, 1), 16)         # 16-row multiple: safe for bf16 tiles


def _pad_rows(x, n_rows, value=0):
    pad = n_rows - x.shape[0]
    if pad == 0:
        return x
    return jnp.concatenate(
        [x, jnp.full((pad,) + x.shape[1:], value, x.dtype)], axis=0)


def _mxu_dot(x, w):
    """bf16 MXU matmul with f32 accumulation when the weight is bf16."""
    if w.dtype == jnp.bfloat16:
        return jnp.dot(x.astype(jnp.bfloat16), w, preferred_element_type=jnp.float32)
    return jnp.dot(x.astype(jnp.float32), w, preferred_element_type=jnp.float32)


def _tile_stats(h2, n_valid, tm):
    """Masked per-tile [sum; sum_sq; 0...] block of shape (8, D) for two-pass BN."""
    row = pl.program_id(0) * tm + lax.broadcasted_iota(jnp.int32, (tm, 1), 0)
    hm = jnp.where(row < n_valid, h2, 0.0)
    s = jnp.sum(hm, axis=0, keepdims=True)
    q = jnp.sum(hm * hm, axis=0, keepdims=True)
    rows8 = lax.broadcasted_iota(jnp.int32, (8, 1), 0)
    return jnp.where(rows8 == 0, s, jnp.where(rows8 == 1, q, 0.0))


def bn_scale_shift(stats, n_valid, gamma, beta, eps=1e-5):
    """Tiny f32 glue reduction over per-tile partials -> BN (scale, shift) (1, D)."""
    d = stats.shape[-1]
    st = stats.reshape(-1, 8, d)
    s = jnp.sum(st[:, 0, :], axis=0)
    q = jnp.sum(st[:, 1, :], axis=0)
    mu = s / n_valid
    var = jnp.maximum(q / n_valid - mu * mu, 0.0)   # biased variance (BN train mode)
    scale = gamma.reshape(-1) * lax.rsqrt(var + eps)
    shift = beta.reshape(-1) - mu * scale
    return scale.reshape(1, d), shift.reshape(1, d)


# ----------------------------------------------------------------------------
# Pallas kernels
# ----------------------------------------------------------------------------
def _mlp_pass1_kernel(*refs, two_in, has_aff1, has_aff2, act2, with_stats,
                      n_valid, tm):
    """Fused [affine+ReLU] -> Linear -> ReLU -> Linear -> [act2] (+ BN stat partials).

    Optional second input x2 with its own W1 slice replaces torch.cat([x, x2]);
    the optional per-input affine (scale, shift) + ReLU fuses an upstream
    BatchNorm (so that tensor never hits HBM).
    """
    it = iter(refs)
    x_ref = next(it)
    x2_ref = next(it) if two_in else None
    sc1_ref = next(it) if has_aff1 else None
    sh1_ref = next(it) if has_aff1 else None
    sc2_ref = next(it) if has_aff2 else None
    sh2_ref = next(it) if has_aff2 else None
    w1a_ref = next(it)
    w1b_ref = next(it) if two_in else None
    b1_ref, w2_ref, b2_ref = next(it), next(it), next(it)
    h_ref = next(it)
    st_ref = next(it) if with_stats else None

    x = x_ref[...].astype(jnp.float32)
    if has_aff1:
        x = jnp.maximum(x * sc1_ref[...] + sh1_ref[...], 0.0)
    w1a = w1a_ref[...]
    if w1a.shape[0] == 1:                 # in_features == 1: broadcast, skip K=1 matmul
        h1 = x * w1a.astype(jnp.float32)
    else:
        h1 = _mxu_dot(x, w1a)
    if two_in:
        x2 = x2_ref[...].astype(jnp.float32)
        if has_aff2:
            x2 = jnp.maximum(x2 * sc2_ref[...] + sh2_ref[...], 0.0)
        w1b = w1b_ref[...]
        if w1b.shape[0] == 1:
            h1 = h1 + x2 * w1b.astype(jnp.float32)
        else:
            h1 = h1 + _mxu_dot(x2, w1b)
    h1 = jnp.maximum(h1 + b1_ref[...], 0.0)
    h2 = _mxu_dot(h1, w2_ref[...]) + b2_ref[...]
    if act2 == "relu":
        h2 = jnp.maximum(h2, 0.0)
    elif act2 == "sigmoid":
        h2 = jax.nn.sigmoid(h2)
    h_ref[...] = h2.astype(h_ref.dtype)
    if with_stats:
        st_ref[...] = _tile_stats(h2, n_valid, tm)


def _var_side_kernel(x_ref, wa1_ref, ba1_ref, wa2_ref, ba2_ref,
                     wj1x_ref, wj1a_ref, bj1_ref, wj2_ref, bj2_ref,
                     ass_ref, jv_ref, st_ref, *, n_valid, tm):
    """Fused shared var-assignment MLP + VarCon joint_var pass-1 (concat-free)."""
    x = x_ref[...].astype(jnp.float32)
    a1 = jnp.maximum(_mxu_dot(x, wa1_ref[...]) + ba1_ref[...], 0.0)
    ass = jax.nn.sigmoid(_mxu_dot(a1, wa2_ref[...]) + ba2_ref[...])
    h1 = jnp.maximum(
        _mxu_dot(x, wj1x_ref[...]) + ass * wj1a_ref[...].astype(jnp.float32)
        + bj1_ref[...], 0.0)
    jv = jnp.maximum(_mxu_dot(h1, wj2_ref[...]) + bj2_ref[...], 0.0)
    ass_ref[...] = ass
    jv_ref[...] = jv
    st_ref[...] = _tile_stats(jv, n_valid, tm)


def _bn_apply_kernel(h_ref, sc_ref, sh_ref, o_ref, *, final_relu):
    y = h_ref[...].astype(jnp.float32) * sc_ref[...] + sh_ref[...]
    if final_relu:
        y = jnp.maximum(y, 0.0)
    o_ref[...] = y.astype(o_ref.dtype)


def _prop_vc_kernel(src_ref, dst_ref, efv_ref, ass_ref,
                    jv_ref, jsc_ref, jsh_ref, ee_ref, esc_ref, esh_ref,
                    agg_ref, err_ref, *, te, n_edges):
    """var -> con propagate fused with the ErrorLayer propagate (aggr='add').

    agg[dst] += relu(BN(jv)[src] + BN(edge_emb))       (gather + scatter, O(E*h))
    err[dst] += ass[src] * edge_attr
    Grid: edge tiles ("arbitrary"); accumulators stay resident in VMEM.
    Edge indices / raw edge attrs / var assignments live in SMEM.
    """
    @pl.when(pl.program_id(0) == 0)
    def _init():
        agg_ref[...] = jnp.zeros_like(agg_ref)
        err_ref[...] = jnp.zeros_like(err_ref)

    base = pl.program_id(0) * te
    jsc = jsc_ref[...]
    jsh = jsh_ref[...]
    esc = esc_ref[...]
    esh = esh_ref[...]

    def body(e, carry):
        eg = base + e
        valid = jnp.where(eg < n_edges, 1.0, 0.0)
        s = src_ref[eg]
        d = dst_ref[eg]
        jrow = jv_ref[pl.ds(s, 1), :] * jsc + jsh          # fused BN on gathered row
        erow = ee_ref[pl.ds(e, 1), :] * esc + esh
        msg = jnp.maximum(jrow + erow, 0.0) * valid
        agg_ref[pl.ds(d, 1), :] = agg_ref[pl.ds(d, 1), :] + msg
        errv = (ass_ref[s] * efv_ref[eg]) * valid
        err_ref[pl.ds(d, 1), :] = err_ref[pl.ds(d, 1), :] + errv
        return carry

    lax.fori_loop(0, te, body, 0)


def _prop_cv_kernel(src_ref, dst_ref, jc_ref, jsc_ref, jsh_ref,
                    ee_ref, esc_ref, esh_ref, agg_ref, *, te, n_edges):
    """con -> var propagate: agg[dst] += relu(BN(jc)[src] + BN(edge_emb))."""
    @pl.when(pl.program_id(0) == 0)
    def _init():
        agg_ref[...] = jnp.zeros_like(agg_ref)

    base = pl.program_id(0) * te
    jsc = jsc_ref[...]
    jsh = jsh_ref[...]
    esc = esc_ref[...]
    esh = esh_ref[...]

    def body(e, carry):
        eg = base + e
        valid = jnp.where(eg < n_edges, 1.0, 0.0)
        s = src_ref[eg]
        d = dst_ref[eg]
        jrow = jc_ref[pl.ds(s, 1), :] * jsc + jsh
        erow = ee_ref[pl.ds(e, 1), :] * esc + esh
        msg = jnp.maximum(jrow + erow, 0.0) * valid
        agg_ref[pl.ds(d, 1), :] = agg_ref[pl.ds(d, 1), :] + msg
        return carry

    lax.fori_loop(0, te, body, 0)


def _seg_softmax_kernel(h_ref, sc_ref, sh_ref, idx_ref, o_ref, *, num_graphs, n_valid):
    """BN-apply + torch_geometric.utils.softmax(x, index) with per-segment max."""
    z = h_ref[...].astype(jnp.float32) * sc_ref[...] + sh_ref[...]
    idx = idx_ref[...]
    rows = lax.broadcasted_iota(jnp.int32, (z.shape[0], 1), 0)
    valid = rows < n_valid
    neg = jnp.finfo(jnp.float32).min
    zm = jnp.where(valid, z, neg)

    def seg_max(g, carry):
        m = jnp.max(jnp.where(idx == g, zm, neg), axis=0, keepdims=True)
        return jnp.where(idx == g, m, carry)

    shift = lax.fori_loop(0, num_graphs, seg_max, jnp.zeros_like(z))
    e = jnp.where(valid, jnp.exp(z - shift), 0.0)

    def seg_sum(g, carry):
        s = jnp.sum(jnp.where(idx == g, e, 0.0), axis=0, keepdims=True)
        return jnp.where(idx == g, s, carry)

    den = lax.fori_loop(0, num_graphs, seg_sum, jnp.ones_like(z))
    # TODO(synk): row-tiled variant with scalar-prefetched per-graph offsets.
    o_ref[...] = (e / jnp.maximum(den, 1e-16)).astype(o_ref.dtype)


def _head_kernel(*refs, n_x, regression):
    """lin1..lin3 (ReLU), lin4, log_softmax; consumes the x_var list concat-free."""
    x_refs = refs[:n_x]
    w1_ref, b1_ref, w2_ref, b2_ref, w3_ref, b3_ref, w4_ref, b4_ref, o_ref = refs[n_x:]
    h_dim = x_refs[0].shape[1]
    acc = b1_ref[...]
    for j, r in enumerate(x_refs):
        acc = acc + _mxu_dot(r[...], w1_ref[j * h_dim:(j + 1) * h_dim, :])
    h = jnp.maximum(acc, 0.0)
    h = jnp.maximum(_mxu_dot(h, w2_ref[...]) + b2_ref[...], 0.0)
    h = jnp.maximum(_mxu_dot(h, w3_ref[...]) + b3_ref[...], 0.0)
    y = _mxu_dot(h, w4_ref[...]) + b4_ref[...]
    if not regression:
        m = jnp.max(y, axis=-1, keepdims=True)
        y = y - (m + jnp.log(jnp.sum(jnp.exp(y - m), axis=-1, keepdims=True)))
    o_ref[...] = y


# ----------------------------------------------------------------------------
# pallas_call wrappers
# ----------------------------------------------------------------------------
def mlp_pass1(x, w1a, b1, w2, b2, *, x2=None, w1b=None, aff1=None, aff2=None,
              act2="none", with_stats=False, tm, n_valid,
              out_dtype=jnp.float32):
    np_, d_in = x.shape
    d_mid = w1a.shape[1]
    d_out = w2.shape[1]
    grid = (np_ // tm,)
    two_in = x2 is not None
    kern = functools.partial(_mlp_pass1_kernel, two_in=two_in,
                             has_aff1=aff1 is not None, has_aff2=aff2 is not None,
                             act2=act2, with_stats=with_stats, n_valid=n_valid, tm=tm)

    arrays = [x]
    in_specs = [pl.BlockSpec((tm, d_in), lambda i: (i, 0))]
    if two_in:
        arrays.append(x2)
        in_specs.append(pl.BlockSpec((tm, x2.shape[1]), lambda i: (i, 0)))

    def _full(a):
        arrays.append(a)
        in_specs.append(pl.BlockSpec(a.shape, lambda i: (0, 0)))

    if aff1 is not None:
        _full(aff1[0]); _full(aff1[1])
    if aff2 is not None:
        _full(aff2[0]); _full(aff2[1])
    _full(w1a)
    if two_in:
        _full(w1b)
    _full(b1); _full(w2); _full(b2)

    out_shape = [jax.ShapeDtypeStruct((np_, d_out), out_dtype)]
    out_specs = [pl.BlockSpec((tm, d_out), lambda i: (i, 0))]
    if with_stats:
        out_shape.append(jax.ShapeDtypeStruct((grid[0] * 8, d_out), jnp.float32))
        out_specs.append(pl.BlockSpec((8, d_out), lambda i: (i, 0)))

    flops = 2 * np_ * (d_in * d_mid + d_mid * d_out) * (2 if two_in else 1)
    res = pl.pallas_call(
        kern, grid=grid, in_specs=in_specs, out_specs=out_specs, out_shape=out_shape,
        compiler_params=pltpu.CompilerParams(
            dimension_semantics=("parallel",), vmem_limit_bytes=_VMEM_LIMIT),
        cost_estimate=pl.CostEstimate(
            flops=flops, transcendentals=0,
            bytes_accessed=4 * (np_ * (d_in + 2 * d_out)
                                + d_in * d_mid + d_mid * d_out)),
    )(*arrays)
    if with_stats:
        return res[0], res[1]
    return res[0], None


def var_side(x, wa1, ba1, wa2, ba2, wj1x, wj1a, bj1, wj2, bj2, *, tm, n_valid):
    np_, h_in = x.shape
    h = wj2.shape[1]
    grid = (np_ // tm,)
    kern = functools.partial(_var_side_kernel, n_valid=n_valid, tm=tm)
    full = lambda a: pl.BlockSpec(a.shape, lambda i: (0, 0))
    in_specs = [pl.BlockSpec((tm, h_in), lambda i: (i, 0)),
                full(wa1), full(ba1), full(wa2), full(ba2),
                full(wj1x), full(wj1a), full(bj1), full(wj2), full(bj2)]
    out_specs = [pl.BlockSpec((tm, 1), lambda i: (i, 0)),
                 pl.BlockSpec((tm, h), lambda i: (i, 0)),
                 pl.BlockSpec((8, h), lambda i: (i, 0))]
    out_shape = [jax.ShapeDtypeStruct((np_, 1), jnp.float32),
                 jax.ShapeDtypeStruct((np_, h), jnp.float32),
                 jax.ShapeDtypeStruct((grid[0] * 8, h), jnp.float32)]
    flops = 2 * np_ * (h_in * wa1.shape[1] + wa1.shape[1] + h_in * h + h * h)
    return pl.pallas_call(
        kern, grid=grid, in_specs=in_specs, out_specs=out_specs, out_shape=out_shape,
        compiler_params=pltpu.CompilerParams(
            dimension_semantics=("parallel",), vmem_limit_bytes=_VMEM_LIMIT),
        cost_estimate=pl.CostEstimate(flops=flops, transcendentals=np_,
                                      bytes_accessed=4 * np_ * (h_in + h + 1)),
    )(x, wa1, ba1, wa2, ba2, wj1x, wj1a, bj1, wj2, bj2)


def bn_apply(h_pre, scale, shift, *, final_relu, tm, out_dtype=jnp.float32):
    np_, d = h_pre.shape
    kern = functools.partial(_bn_apply_kernel, final_relu=final_relu)
    return pl.pallas_call(
        kern, grid=(np_ // tm,),
        in_specs=[pl.BlockSpec((tm, d), lambda i: (i, 0)),
                  pl.BlockSpec((1, d), lambda i: (0, 0)),
                  pl.BlockSpec((1, d), lambda i: (0, 0))],
        out_specs=pl.BlockSpec((tm, d), lambda i: (i, 0)),
        out_shape=jax.ShapeDtypeStruct((np_, d), out_dtype),
        compiler_params=pltpu.CompilerParams(
            dimension_semantics=("parallel",), vmem_limit_bytes=_VMEM_LIMIT),
    )(h_pre, scale, shift)


def prop_var_to_con(src, dst, efv_s, ass_s, jv_pre, jsc, jsh, ee_pre, esc, esh,
                    *, ncp, te, n_edges):
    evp = src.shape[0]
    nvp, h = jv_pre.shape
    grid = (evp // te,)
    smem = pl.BlockSpec(memory_space=pltpu.MemorySpace.SMEM)
    full = lambda s: pl.BlockSpec(s, lambda k: (0, 0))
    in_specs = [smem, smem, smem, smem,
                full((nvp, h)), full((1, h)), full((1, h)),
                pl.BlockSpec((te, h), lambda k: (k, 0)),
                full((1, h)), full((1, h))]
    out_specs = [full((ncp, h)), full((ncp, 1))]
    out_shape = [jax.ShapeDtypeStruct((ncp, h), jnp.float32),
                 jax.ShapeDtypeStruct((ncp, 1), jnp.float32)]
    kern = functools.partial(_prop_vc_kernel, te=te, n_edges=n_edges)
    # TODO(synk): 2-D (node-tile x edge-tile) grid with dst-sorted edges so the
    # accumulator is tiled and the dst ranges can be split over v7x's 2 TCs.
    return pl.pallas_call(
        kern, grid=grid, in_specs=in_specs, out_specs=out_specs, out_shape=out_shape,
        compiler_params=pltpu.CompilerParams(
            dimension_semantics=("arbitrary",), vmem_limit_bytes=_VMEM_LIMIT),
        cost_estimate=pl.CostEstimate(
            flops=12 * evp * (h + 1), transcendentals=0,
            bytes_accessed=4 * (evp * (h + 3) + nvp * (h + 1) + ncp * (h + 1))),
    )(src, dst, efv_s, ass_s, jv_pre, jsc, jsh, ee_pre, esc, esh)


def prop_con_to_var(src, dst, jc_pre, jsc, jsh, ee_pre, esc, esh, *, nvp, te, n_edges):
    ecp = src.shape[0]
    ncp, h = jc_pre.shape
    grid = (ecp // te,)
    smem = pl.BlockSpec(memory_space=pltpu.MemorySpace.SMEM)
    full = lambda s: pl.BlockSpec(s, lambda k: (0, 0))
    in_specs = [smem, smem,
                full((ncp, h)), full((1, h)), full((1, h)),
                pl.BlockSpec((te, h), lambda k: (k, 0)),
                full((1, h)), full((1, h))]
    kern = functools.partial(_prop_cv_kernel, te=te, n_edges=n_edges)
    return pl.pallas_call(
        kern, grid=grid, in_specs=in_specs,
        out_specs=full((nvp, h)),
        out_shape=jax.ShapeDtypeStruct((nvp, h), jnp.float32),
        compiler_params=pltpu.CompilerParams(
            dimension_semantics=("arbitrary",), vmem_limit_bytes=_VMEM_LIMIT),
        cost_estimate=pl.CostEstimate(
            flops=10 * ecp * h, transcendentals=0,
            bytes_accessed=4 * (ecp * (h + 2) + ncp * h + nvp * h)),
    )(src, dst, jc_pre, jsc, jsh, ee_pre, esc, esh)


def seg_softmax_bn(h_pre, scale, shift, idx, num_graphs, *, n_valid):
    ncp, h = h_pre.shape
    kern = functools.partial(_seg_softmax_kernel, num_graphs=num_graphs,
                             n_valid=n_valid)
    return pl.pallas_call(
        kern, out_shape=jax.ShapeDtypeStruct((ncp, h), jnp.bfloat16),
        compiler_params=pltpu.CompilerParams(vmem_limit_bytes=_VMEM_LIMIT),
    )(h_pre, scale, shift, idx)


def head_forward(x_list, head_params, *, regression, tm):
    nvp = x_list[0].shape[0]
    w1, b1, w2, b2, w3, b3, w4, b4 = head_params
    out_dim = w4.shape[1]
    kern = functools.partial(_head_kernel, n_x=len(x_list), regression=regression)
    in_specs = [pl.BlockSpec((tm, x.shape[1]), lambda i: (i, 0)) for x in x_list]
    for w in (w1, b1, w2, b2, w3, b3, w4, b4):
        in_specs.append(pl.BlockSpec(w.shape, lambda i: (0, 0)))
    flops = 2 * nvp * (w1.shape[0] * w1.shape[1] + w2.shape[0] * w2.shape[1]
                       + w3.shape[0] * w3.shape[1] + w4.shape[0] * w4.shape[1])
    return pl.pallas_call(
        kern, grid=(nvp // tm,), in_specs=in_specs,
        out_specs=pl.BlockSpec((tm, out_dim), lambda i: (i, 0)),
        out_shape=jax.ShapeDtypeStruct((nvp, out_dim), jnp.float32),
        compiler_params=pltpu.CompilerParams(
            dimension_semantics=("parallel",), vmem_limit_bytes=_VMEM_LIMIT),
        cost_estimate=pl.CostEstimate(flops=flops, transcendentals=nvp * out_dim,
                                      bytes_accessed=2 * nvp * (w1.shape[0] + out_dim)),
    )(*x_list, w1, b1, w2, b2, w3, b3, w4, b4)


# ----------------------------------------------------------------------------
# Deterministic parameter initialization (synthetic; no checkpoint load)
# ----------------------------------------------------------------------------
def init_linear(key, fan_in, fan_out):
    kw, kb = jax.random.split(key)
    bound = 1.0 / float(fan_in) ** 0.5
    w = jax.random.uniform(kw, (fan_in, fan_out), jnp.float32, -bound, bound)
    b = jax.random.uniform(kb, (1, fan_out), jnp.float32, -bound, bound)
    return w, b


def init_mlp2(key, d_in, d_mid, d_out):
    k1, k2 = jax.random.split(key)
    w1, b1 = init_linear(k1, d_in, d_mid)
    w2, b2 = init_linear(k2, d_mid, d_out)
    gamma = jnp.ones((1, d_out), jnp.float32)     # BN weight
    beta = jnp.zeros((1, d_out), jnp.float32)     # BN bias
    return (w1, b1, w2, b2, gamma, beta)


def init_params(key, hidden, num_layers, regression=False):
    ki = iter(jax.random.split(key, 4 + 10 * num_layers))
    p = {}
    p["var_enc"] = init_mlp2(next(ki), 2, hidden, hidden)
    p["con_enc"] = init_mlp2(next(ki), 2, hidden, hidden)
    layers = []
    for _ in range(num_layers):
        lp = {}
        lp["ass"] = init_mlp2(next(ki), hidden, hidden, 1)          # layers_ass[i]
        # VarConBipartiteLayer
        lp["vc_edge"] = init_mlp2(next(ki), 1, hidden, hidden)
        lp["vc_joint"] = init_mlp2(next(ki), hidden + 1, hidden, hidden)
        lp["vc_mlp"] = init_mlp2(next(ki), hidden, hidden, hidden)
        lp["vc_eps"] = jnp.float32(0.0)
        # ConVarBipartiteLayer
        lp["cv_edge"] = init_mlp2(next(ki), 1, hidden, hidden)
        lp["cv_joint"] = init_mlp2(next(ki), 2 * hidden, hidden, hidden)
        lp["cv_mlp"] = init_mlp2(next(ki), hidden, hidden, hidden)
        lp["cv_eps"] = jnp.float32(0.0)
        # ErrorLayer
        lp["err_enc"] = init_mlp2(next(ki), 1, hidden, hidden)
        layers.append(lp)
    p["layers"] = layers
    hk = jax.random.split(next(ki), 4)
    out_dim = 1 if regression else 2
    p["head"] = (*init_linear(hk[0], (num_layers + 1) * hidden, hidden),
                 *init_linear(hk[1], hidden, hidden),
                 *init_linear(hk[2], hidden, hidden),
                 *init_linear(hk[3], hidden, out_dim))
    return p


# ----------------------------------------------------------------------------
# SimpleNet forward
# ----------------------------------------------------------------------------
def simplenet_forward(params, data, num_layers, regression=False):
    vnf = data["var_node_features"]
    cnf = data["con_node_features"]
    ei_var = data["edge_index_var"]
    ei_con = data["edge_index_con"]
    ef_var = data["edge_features_var"]
    ef_con = data["edge_features_con"]
    rhs = data["rhs"]
    index = data["index"]
    num_graphs = int(data["num_graphs"])

    n_var, n_con = vnf.shape[0], cnf.shape[0]
    e_var, e_con = ef_var.shape[0], ef_con.shape[0]
    hidden = params["var_enc"][2].shape[1]
    B16 = lambda w: w.astype(jnp.bfloat16) if w.shape[0] >= 8 else w

    # Row / edge tiles (padded row spaces; padded rows quarantined & sliced off).
    tm_v = _pick_tile(n_var)
    tm_c = _pick_tile(n_con)
    te_v = min(_pick_tile(e_var), 512)
    te_c = min(_pick_tile(e_con), 512)
    nvp = _round_up(n_var, tm_v)
    ncp = _round_up(n_con, tm_c)
    evp = _round_up(e_var, te_v)
    ecp = _round_up(e_con, te_c)

    vnf_p = _pad_rows(vnf, nvp)
    cnf_p = _pad_rows(cnf, ncp)
    efv_p = _pad_rows(ef_var, evp)
    efc_p = _pad_rows(ef_con, ecp)
    rhs_p = _pad_rows(rhs, ncp)
    idx_p = _pad_rows(index.reshape(-1, 1).astype(jnp.int32), ncp, num_graphs)
    # Edge indices / raw edge attrs flattened for SMEM; padded edges point to
    # row 0 and are masked out inside the propagate kernels.
    srcv = _pad_rows(ei_var[0].reshape(-1).astype(jnp.int32), evp, 0)
    dstv = _pad_rows(ei_var[1].reshape(-1).astype(jnp.int32), evp, 0)
    srcc = _pad_rows(ei_con[0].reshape(-1).astype(jnp.int32), ecp, 0)
    dstc = _pad_rows(ei_con[1].reshape(-1).astype(jnp.int32), ecp, 0)
    efv_s = _pad_rows(ef_var.reshape(-1).astype(jnp.float32), evp, 0.0)

    # --- node encoders (no BN) ---
    w1, b1, w2, b2, _, _ = params["var_enc"]
    var0, _ = mlp_pass1(vnf_p, w1, b1, B16(w2), b2, act2="none",
                        tm=tm_v, n_valid=n_var, out_dtype=jnp.bfloat16)
    w1, b1, w2, b2, _, _ = params["con_enc"]
    con0, _ = mlp_pass1(cnf_p, w1, b1, B16(w2), b2, act2="none",
                        tm=tm_c, n_valid=n_con, out_dtype=jnp.bfloat16)
    x_var = [var0]
    con_prev, con_prev_aff = con0, None     # pre-BN con features + fused BN affine

    for i in range(num_layers):
        lp = params["layers"][i]

        # --- shared var-assignment MLP + VarCon joint_var pass-1 (concat-free) ---
        wa1, ba1, wa2, ba2, _, _ = lp["ass"]
        wj1, bj1, wj2, bj2, gj, btj = lp["vc_joint"]
        wj1x, wj1a = wj1[:hidden, :], wj1[hidden:, :]
        ass, jv_pre, jv_stats = var_side(x_var[-1], B16(wa1), ba1, B16(wa2), ba2,
                                         B16(wj1x), wj1a, bj1, B16(wj2), bj2,
                                         tm=tm_v, n_valid=n_var)
        jsc, jsh = bn_scale_shift(jv_stats, n_var, gj, btj)

        # --- VarCon edge encoder (pass 1); BN fused into the propagate ---
        we1, be1, we2, be2, ge, bte = lp["vc_edge"]
        eev_pre, eev_stats = mlp_pass1(efv_p, we1, be1, B16(we2), be2, act2="relu",
                                       with_stats=True, tm=te_v, n_valid=e_var)
        esc, esh = bn_scale_shift(eev_stats, e_var, ge, bte)

        # --- fused propagate: VarCon + ErrorLayer messages (aggr='add') ---
        agg_con, err_agg = prop_var_to_con(srcv, dstv, efv_s, ass.reshape(-1),
                                           jv_pre, jsc, jsh, eev_pre, esc, esh,
                                           ncp=ncp, te=te_v, n_edges=e_var)

        # --- ErrorLayer encoder (−rhs fused via w1b=−W1) + segment softmax ---
        wr1, br1, wr2, br2, gr, btr = lp["err_enc"]
        err_h, err_stats = mlp_pass1(err_agg, wr1, br1, B16(wr2), br2,
                                     x2=rhs_p, w1b=-wr1, act2="relu",
                                     with_stats=True, tm=tm_c, n_valid=n_con)
        rsc, rsh = bn_scale_shift(err_stats, n_con, gr, btr)
        x_err = seg_softmax_bn(err_h, rsc, rsh, idx_p, num_graphs, n_valid=n_con)

        # --- VarCon GIN mlp: (1+eps)*x_con + agg fused via x2/w1b; BN left fused ---
        wm1, bm1, wm2, bm2, gm, btm = lp["vc_mlp"]
        con_h, con_stats = mlp_pass1(agg_con, B16(wm1), bm1, B16(wm2), bm2,
                                     x2=con_prev, w1b=B16((1.0 + lp["vc_eps"]) * wm1),
                                     aff2=con_prev_aff, act2="relu",
                                     with_stats=True, tm=tm_c, n_valid=n_con,
                                     out_dtype=jnp.bfloat16)
        msc, msh = bn_scale_shift(con_stats, n_con, gm, btm)
        # new_con = relu(BN(con_h)) is never materialized; consumers fuse (msc,msh).

        # --- ConVar edge encoder (pass 1) ---
        wc1, bc1, wc2, bc2, gc, btc = lp["cv_edge"]
        eec_pre, eec_stats = mlp_pass1(efc_p, wc1, bc1, B16(wc2), bc2, act2="relu",
                                       with_stats=True, tm=te_c, n_valid=e_con)
        csc, csh = bn_scale_shift(eec_stats, e_con, gc, btc)

        # --- ConVar joint_var on (new_con, x_err): BN+relu of con fused as aff1 ---
        wq1, bq1, wq2, bq2, gq, btq = lp["cv_joint"]
        wq1c, wq1e = wq1[:hidden, :], wq1[hidden:, :]
        jc_pre, jc_stats = mlp_pass1(con_h, B16(wq1c), bq1, B16(wq2), bq2,
                                     x2=x_err, w1b=B16(wq1e), aff1=(msc, msh),
                                     act2="relu", with_stats=True,
                                     tm=tm_c, n_valid=n_con)
        qsc, qsh = bn_scale_shift(jc_stats, n_con, gq, btq)

        # --- fused propagate: ConVar messages (aggr='add') ---
        agg_var = prop_con_to_var(srcc, dstc, jc_pre, qsc, qsh, eec_pre, csc, csh,
                                  nvp=nvp, te=te_c, n_edges=e_con)

        # --- ConVar GIN mlp: (1+eps)*x_var + agg fused; then BN + outer ReLU ---
        wv1, bv1, wv2, bv2, gv, btv = lp["cv_mlp"]
        var_h, var_stats = mlp_pass1(agg_var, B16(wv1), bv1, B16(wv2), bv2,
                                     x2=x_var[-1], w1b=B16((1.0 + lp["cv_eps"]) * wv1),
                                     act2="relu", with_stats=True,
                                     tm=tm_v, n_valid=n_var, out_dtype=jnp.bfloat16)
        vsc, vsh = bn_scale_shift(var_stats, n_var, gv, btv)
        new_var = bn_apply(var_h, vsc, vsh, final_relu=True, tm=tm_v,
                           out_dtype=jnp.bfloat16)
        x_var.append(new_var)

        con_prev, con_prev_aff = con_h, (msc, msh)

    hw = params["head"]
    head_w = (B16(hw[0]), hw[1], B16(hw[2]), hw[3], B16(hw[4]), hw[5], B16(hw[6]), hw[7])
    out = head_forward(x_var, head_w, regression=regression, tm=tm_v)
    out = out[:n_var]
    if regression:
        out = out.reshape(-1)
    return out


# ----------------------------------------------------------------------------
# Example run
# ----------------------------------------------------------------------------
if __name__ == "__main__":
    # hidden=128 keeps the feature dim lane-dense (full 128-lane vregs / MXU tiles).
    hidden, num_layers = 128, 2
    n_var, n_con, n_edges, num_graphs = 6, 4, 10, 2

    key = jax.random.PRNGKey(0)
    kp, kd = jax.random.split(key)
    params = init_params(kp, hidden, num_layers, regression=False)

    dk = jax.random.split(kd, 8)
    ei_var = jnp.stack([
        jax.random.randint(dk[0], (n_edges,), 0, n_var),   # source = var node
        jax.random.randint(dk[1], (n_edges,), 0, n_con),   # target = con node
    ]).astype(jnp.int32)
    ei_con = ei_var[::-1]                                   # reversed bipartite edges

    data = {
        "var_node_features": jax.random.normal(dk[2], (n_var, 2), jnp.float32),
        "con_node_features": jax.random.normal(dk[3], (n_con, 2), jnp.float32),
        "edge_index_var": ei_var,
        "edge_index_con": ei_con,
        "edge_features_var": jax.random.normal(dk[4], (n_edges, 1), jnp.float32),
        "edge_features_con": jax.random.normal(dk[5], (n_edges, 1), jnp.float32),
        "rhs": jax.random.normal(dk[6], (n_con, 1), jnp.float32),
        "index": jnp.array([0, 0, 1, 1], dtype=jnp.int32),  # graph id per con node
        "num_graphs": num_graphs,
        # data.obj is read by the PyTorch forward but never used; omitted here.
    }

    out = simplenet_forward(params, data, num_layers, regression=False)
    out = jax.block_until_ready(out)
    assert out.shape == (n_var, 2)
    assert bool(jnp.all(jnp.isfinite(out)))
    print("KERNEL_OK")
</pallas_src>

<mosaic_0001>
module attributes {stable_mosaic.version = 11 : i64} {
  func.func @_mlp_pass1_kernel(%arg0: i32, %arg1: memref<16x2xf32, #tpu.memory_space<vmem>>, %arg2: memref<2x128xf32, #tpu.memory_space<vmem>>, %arg3: memref<1x128xf32, #tpu.memory_space<vmem>>, %arg4: memref<128x128xbf16, #tpu.memory_space<vmem>>, %arg5: memref<1x128xf32, #tpu.memory_space<vmem>>, %arg6: memref<16x128xbf16, #tpu.memory_space<vmem>>) attributes {dimension_semantics = [#tpu.dimension_semantics<parallel>], iteration_bounds = array<i64: 1>, scalar_prefetch = 0 : i64, scratch_operands = 0 : i64, tpu.core_type = #tpu.core_type<tc>, window_params = [{transform_indices = @transform_0, window_bounds = array<i64: 16, 2>}, {pipeline_mode = #tpu.pipeline_mode<synchronous>, transform_indices = @transform_1, window_bounds = array<i64: 2, 128>}, {pipeline_mode = #tpu.pipeline_mode<synchronous>, transform_indices = @transform_2, window_bounds = array<i64: 1, 128>}, {pipeline_mode = #tpu.pipeline_mode<synchronous>, transform_indices = @transform_3, window_bounds = array<i64: 128, 128>}, {pipeline_mode = #tpu.pipeline_mode<synchronous>, transform_indices = @transform_4, window_bounds = array<i64: 1, 128>}, {transform_indices = @transform_5, window_bounds = array<i64: 16, 128>}]} {
    %c0 = arith.constant 0 : index
    %c0_0 = arith.constant 0 : index
    %0 = vector.load %arg1[%c0, %c0_0] : memref<16x2xf32, #tpu.memory_space<vmem>>, vector<16x2xf32>
    %c0_1 = arith.constant 0 : index
    %c0_2 = arith.constant 0 : index
    %1 = vector.load %arg2[%c0_1, %c0_2] : memref<2x128xf32, #tpu.memory_space<vmem>>, vector<2x128xf32>
    %cst = arith.constant dense<0.000000e+00> : vector<16x128xf32>
    %2 = tpu.matmul %0, %1, %cst {dimension_numbers = #tpu.dot_dimension_numbers<[1], [0], [0], [1], [0, 0, 1, 1], [], []>} : vector<16x2xf32>, vector<2x128xf32>, vector<16x128xf32> -> vector<16x128xf32>
    %c0_3 = arith.constant 0 : index
    %c0_4 = arith.constant 0 : index
    %3 = vector.load %arg3[%c0_3, %c0_4] : memref<1x128xf32, #tpu.memory_space<vmem>>, vector<1x128xf32>
    %4 = vector.broadcast %3 : vector<1x128xf32> to vector<16x128xf32>
    %5 = arith.addf %2, %4 : vector<16x128xf32>
    %cst_5 = arith.constant 0.000000e+00 : f32
    %6 = vector.broadcast %cst_5 : f32 to vector<16x128xf32>
    %7 = arith.maximumf %5, %6 : vector<16x128xf32>
    %c0_6 = arith.constant 0 : index
    %c0_7 = arith.constant 0 : index
    %8 = vector.load %arg4[%c0_6, %c0_7] : memref<128x128xbf16, #tpu.memory_space<vmem>>, vector<128x128xbf16>
    %9 = arith.truncf %7 : vector<16x128xf32> to vector<16x128xbf16>
    %cst_8 = arith.constant dense<0.000000e+00> : vector<16x128xf32>
    %10 = tpu.matmul %9, %8, %cst_8 {dimension_numbers = #tpu.dot_dimension_numbers<[1], [0], [0], [1], [0, 0, 1, 1], [], []>} : vector<16x128xbf16>, vector<128x128xbf16>, vector<16x128xf32> -> vector<16x128xf32>
    %c0_9 = arith.constant 0 : index
    %c0_10 = arith.constant 0 : index
    %11 = vector.load %arg5[%c0_9, %c0_10] : memref<1x128xf32, #tpu.memory_space<vmem>>, vector<1x128xf32>
    %12 = vector.broadcast %11 : vector<1x128xf32> to vector<16x128xf32>
    %13 = arith.addf %10, %12 : vector<16x128xf32>
    %14 = arith.truncf %13 : vector<16x128xf32> to vector<16x128xbf16>
    %c0_11 = arith.constant 0 : index
    %c0_12 = arith.constant 0 : index
    %15 = vector.load %arg6[%c0_11, %c0_12] : memref<16x128xbf16, #tpu.memory_space<vmem>>, vector<16x128xbf16>
    tpu.vector_store %arg6[%c0_11, %c0_12], %14 {strides = array<i32>} : memref<16x128xbf16, #tpu.memory_space<vmem>>, vector<16x128xbf16>,
    return
  }
  func.func @transform_0(%arg0: i32) -> (i32, i32) {
    %c0_i32 = arith.constant 0 : i32
    %c0_i32_0 = arith.constant 0 : i32
    return %arg0, %c0_i32 : i32, i32
  }
  func.func @transform_1(%arg0: i32) -> (i32, i32) {
    %c0_i32 = arith.constant 0 : i32
    %c0_i32_0 = arith.constant 0 : i32
    %c0_i32_1 = arith.constant 0 : i32
    return %c0_i32, %c0_i32_0 : i32, i32
  }
  func.func @transform_2(%arg0: i32) -> (i32, i32) {
    %c0_i32 = arith.constant 0 : i32
    %c0_i32_0 = arith.constant 0 : i32
    %c0_i32_1 = arith.constant 0 : i32
    return %c0_i32, %c0_i32_0 : i32, i32
  }
  func.func @transform_3(%arg0: i32) -> (i32, i32) {
    %c0_i32 = arith.constant 0 : i32
    %c0_i32_0 = arith.constant 0 : i32
    %c0_i32_1 = arith.constant 0 : i32
    return %c0_i32, %c0_i32_0 : i32, i32
  }
  func.func @transform_4(%arg0: i32) -> (i32, i32) {
    %c0_i32 = arith.constant 0 : i32
    %c0_i32_0 = arith.constant 0 : i32
    %c0_i32_1 = arith.constant 0 : i32
    return %c0_i32, %c0_i32_0 : i32, i32
  }
  func.func @transform_5(%arg0: i32) -> (i32, i32) {
    %c0_i32 = arith.constant 0 : i32
    %c0_i32_0 = arith.constant 0 : i32
    return %arg0, %c0_i32 : i32, i32
  }
}

</mosaic_0001>

<llo_original>
// kernel: tpu_custom_call.1
$region0: #{tpu_custom_call.1}
  #allocation0 [shape = 'u32[]', space=smem, size = 0x4, offset = 0x4, fixed_abs, tag = 'smem constant byte address 0x4 - core index']
  #allocation1 [shape = 'u32[144,128]{1,0:T(1,128)}', space=vmem, size = 0x12000, scoped, tag = 'internal scratch']
  %s0 = inlined_call_operand.vmem [shape: f32[16,2], index: 0, kind: input, shape index: {}]
  %s1 = inlined_call_operand.vmem [shape: f32[2,128], index: 1, kind: input, shape index: {}]
  %s2 = inlined_call_operand.vmem [shape: f32[1,128], index: 2, kind: input, shape index: {}]
  %s3 = inlined_call_operand.hbm [shape: bf16[128,128], index: 3, kind: input, shape index: {}]
  %s4 = inlined_call_operand.vmem [shape: f32[1,128], index: 4, kind: input, shape index: {}]
  %s5 = inlined_call_operand.hbm [shape: bf16[16,128], index: 5, kind: output, shape index: {}]
  %s6 = sld [smem:[#allocation0]]
  $region34: #{tpu_custom_call.1} parent=0
    _
  %s8 = ssub.s32 1, %s6
  %s9 = scalar_select 0, %s8, %s6
  $region1: #{tpu_custom_call.1} parent=0
    #allocation2 [shape = 'u8[32768]{0}', space=vmem, size = 0x8000, scoped, tag = 'input window, operand 3, single buffered']
    #allocation3 [shape = 's32[1]{0}', space=sflag, size = 0x4, scoped, tag = 'scoped memory for tpu_custom_call.1']
    #allocation4 [shape = 's32[1]{0}', space=sflag, size = 0x4, scoped, tag = 'scoped memory for tpu_custom_call.1']
    #allocation5 [shape = 'u8[4096]{0}', space=vmem, size = 0x1000, scoped, tag = 'output window, operand 0, single buffered']
    %10 = vsyncpa [#allocation3], 0
    %11 = vsyncpa [#allocation4], 0
    // Predicated region
    $region2: #{tpu_custom_call.1} parent=1 // pred_check
      _
    $region3: #{tpu_custom_call.1} parent=1 // pred_check_branch
      %13 = sbr.rel (0) target = $region5
    $region4: #{tpu_custom_call.1} parent=1 // pred_region
      _
    $region5: #{tpu_custom_call.1} parent=1 // pred_fallthru
      _
    // Predicated region
    $region6: #{tpu_custom_call.1} parent=1 // pred_check
      _
    $region7: #{tpu_custom_call.1} parent=1 // pred_check_branch
      %15 = sbr.rel (0) target = $region9
    $region8: #{tpu_custom_call.1} parent=1 // pred_region
      _
    $region9: #{tpu_custom_call.1} parent=1 // pred_fallthru
      _
    // Predicated region
    $region10: #{tpu_custom_call.1} parent=1 // pred_check
      _
    $region11: #{tpu_custom_call.1} parent=1 // pred_check_branch
      %17 = sbr.rel (0) target = $region13
    $region12: #{tpu_custom_call.1} parent=1 // pred_region
      _
    $region13: #{tpu_custom_call.1} parent=1 // pred_fallthru
      _
    // Predicated region
    $region14: #{tpu_custom_call.1} parent=1 // pred_check
      _
    $region15: #{tpu_custom_call.1} parent=1 // pred_check_branch
      %19 = sbr.rel (0) target = $region17
    $region16: #{tpu_custom_call.1} parent=1 // pred_region
      %s21 = ssub.s32 1024, 1024
      %22 = vsyncadd [#allocation3], %s21
      %s23 = sshll.u32 [#allocation2], 4
      %s24 = int_to_ptr.vmem [resolvable:$true] %s23
      %29 = dma.hbm_to_vmem [thread:$0]  %s3, 1024, %s24, [#allocation3], 64, 64, 4
    $region17: #{tpu_custom_call.1} parent=1 // pred_fallthru
      _
    // Predicated region
    $region18: #{tpu_custom_call.1} parent=1 // pred_check
      _
    $region19: #{tpu_custom_call.1} parent=1 // pred_check_branch
      %31 = sbr.rel (0) target = $region21
    $region20: #{tpu_custom_call.1} parent=1 // pred_region
      _
    $region21: #{tpu_custom_call.1} parent=1 // pred_fallthru
      _
    // Predicated region
    $region22: #{tpu_custom_call.1} parent=1 // pred_check
      _
    $region23: #{tpu_custom_call.1} parent=1 // pred_check_branch
      %33 = sbr.rel (0) target = $region25
    $region24: #{tpu_custom_call.1} parent=1 // pred_region
      %34 = dma.done [#allocation3], 1024
    $region25: #{tpu_custom_call.1} parent=1 // pred_fallthru
      _
    %v36 = vld [vmem:[%s0] sm:$0xff]
    %v37 = vld [vmem:[%s0 + $0x8] sm:$0xff]
    %v38 = vld [vmem:[%s1] sm:$0x3]
    %v39 = vld [vmem:[%s2] sm:$0x1]
    %v41 = vlaneseq
    %v42 = vshrl.u32 %v41, 7
    %v43 = vsub.s32 0, %v42
    %v44 = vrot.slane %v39, %v43
    %vm46 = vcmask 15360
    %v48 = vsel %vm46, %v36, 0
    %v51 = vsel %vm46, %v37, 0
    %vm53 = vcmask 1041408
    %v55 = vsel %vm53, %v38, 0
    %57 = vmatprep.subr.mxu0 0.0
    %58 = vmatpush1.msra.mxu0 0.0
    %59 = vmatprep.subr.mxu0 0.0
    %60 = vmatpush1.msra.mxu0 0.0
    %61 = vmatprep.subr.mxu0 0.0
    %62 = vmatpush1.msra.mxu0 0.0
    %63 = vmatprep.subr.mxu0 0.0
    %64 = vmatpush1.msra.mxu0 0.0
    %65 = vmatprep.subr.mxu0 0.0
    %66 = vmatpush1.msra.mxu0 0.0
    %67 = vmatprep.subr.mxu0 0.0
    %68 = vmatpush1.msra.mxu0 0.0
    %69 = vmatprep.subr.mxu0 0.0
    %70 = vmatpush1.msra.mxu0 0.0
    %71 = vmatprep.subr.mxu0 0.0
    %72 = vmatpush1.msra.mxu0 0.0
    %73 = vmatprep.subr.mxu0 0.0
    %74 = vmatpush1.msra.mxu0 0.0
    %75 = vmatprep.subr.mxu0 0.0
    %76 = vmatpush1.msra.mxu0 0.0
    %77 = vmatprep.subr.mxu0 0.0
    %78 = vmatpush1.msra.mxu0 0.0
    %79 = vmatprep.subr.mxu0 0.0
    %80 = vmatpush1.msra.mxu0 0.0
    %81 = vmatprep.subr.mxu0 0.0
    %82 = vmatpush1.msra.mxu0 0.0
    %83 = vmatprep.subr.mxu0 0.0
    %84 = vmatpush1.msra.mxu0 0.0
    %85 = vmatprep.subr.mxu0 0.0
    %86 = vmatpush1.msra.mxu0 0.0
    %87 = vmatprep.subr.mxu0 0.0
    %88 = vmatpush1.msra.mxu0 %v55
    %89 = vmatprep.subr.mxu0 0.0
    %90 = vmatpush2.msra.mxu0 0.0
    %91 = vmatprep.subr.mxu0 0.0
    %92 = vmatpush2.msra.mxu0 0.0
    %93 = vmatprep.subr.mxu0 0.0
    %94 = vmatpush2.msra.mxu0 0.0
    %95 = vmatprep.subr.mxu0 0.0
    %96 = vmatpush2.msra.mxu0 0.0
    %97 = vmatprep.subr.mxu0 0.0
    %98 = vmatpush2.msra.mxu0 0.0
    %99 = vmatprep.subr.mxu0 0.0
    %100 = vmatpush2.msra.mxu0 0.0
    %101 = vmatprep.subr.mxu0 0.0
    %102 = vmatpush2.msra.mxu0 0.0
    %103 = vmatprep.subr.mxu0 0.0
    %104 = vmatpush2.msra.mxu0 0.0
    %105 = vmatprep.subr.mxu0 0.0
    %106 = vmatpush2.msra.mxu0 0.0
    %107 = vmatprep.subr.mxu0 0.0
    %108 = vmatpush2.msra.mxu0 0.0
    %109 = vmatprep.subr.mxu0 0.0
    %110 = vmatpush2.msra.mxu0 0.0
    %111 = vmatprep.subr.mxu0 0.0
    %112 = vmatpush2.msra.mxu0 0.0
    %113 = vmatprep.subr.mxu0 0.0
    %114 = vmatpush2.msra.mxu0 0.0
    %115 = vmatprep.subr.mxu0 0.0
    %116 = vmatpush2.msra.mxu0 0.0
    %117 = vmatprep.subr.mxu0 0.0
    %118 = vmatpush2.msra.mxu0 0.0
    %119 = vmatprep.subr.mxu0 0.0
    %120 = vmatpush2.msra.mxu0 0.0
    %121 = vmatprep.mubr.f32.mxu0 0.0
    %122 = vmatmul.mubr.f32.gmra.mxu0 %v48
    %v123 = vpop.f32.mrf.mxu0
    %v124 = vadd.f32 %v44, %v123
    %v125 = vpop.f32.mrf.mxu0
    %126 = vmatprep.mubr.f32.mxu0 0.0
    %127 = vmatmul.mubr.f32.gmra.mxu0 %v51
    %v128 = vpop.f32.mrf.mxu0
    %v129 = vadd.f32 %v44, %v128
    %v130 = vpop.f32.mrf.mxu0
    %131 = vdwg.mxu0
    %v132 = vmax.f32 %v124, 0.0
    %v133 = vmax.f32 %v129, 0.0
    %v134 = vld [vmem:[#allocation2] sm:$0xf]
    %v135 = vld [vmem:[#allocation2 + $0x4] sm:$0xf]
    %v136 = vld [vmem:[#allocation2 + $0x8] sm:$0xf]
    %v137 = vld [vmem:[#allocation2 + $0xc] sm:$0xf]
    %v138 = vld [vmem:[#allocation2 + $0x10] sm:$0xf]
    %v139 = vld [vmem:[#allocation2 + $0x14] sm:$0xf]
    %v140 = vld [vmem:[#allocation2 + $0x18] sm:$0xf]
    %v141 = vld [vmem:[#allocation2 + $0x1c] sm:$0xf]
    %v142 = vld [vmem:[#allocation2 + $0x20] sm:$0xf]
    %v143 = vld [vmem:[#allocation2 + $0x24] sm:$0xf]
    %v144 = vld [vmem:[#allocation2 + $0x28] sm:$0xf]
    %v145 = vld [vmem:[#allocation2 + $0x2c] sm:$0xf]
    %v146 = vld [vmem:[#allocation2 + $0x30] sm:$0xf]
    %v147 = vld [vmem:[#allocation2 + $0x34] sm:$0xf]
    %v148 = vld [vmem:[#allocation2 + $0x38] sm:$0xf]
    %v149 = vld [vmem:[#allocation2 + $0x3c] sm:$0xf]
    %v150 = vpack.c.bf16 %v133, %v132
    %v151 = vld [vmem:[%s4] sm:$0x1]
    %v153 = vlaneseq
    %v154 = vshrl.u32 %v153, 7
    %v155 = vsub.s32 0, %v154
    %v156 = vrot.slane %v151, %v155
    %v174 = vunpack.c.l.b16 %v134
    %v175 = vunpack.c.l.b16 %v135
    %v176 = vunpack.c.l.b16 %v136
    %v177 = vunpack.c.l.b16 %v137
    %v178 = vunpack.c.l.b16 %v138
    %v179 = vunpack.c.l.b16 %v139
    %v180 = vunpack.c.l.b16 %v140
    %v181 = vunpack.c.l.b16 %v141
    %v182 = vunpack.c.l.b16 %v142
    %v183 = vunpack.c.l.b16 %v143
    %v184 = vunpack.c.l.b16 %v144
    %v185 = vunpack.c.l.b16 %v145
    %v186 = vunpack.c.l.b16 %v146
    %v187 = vunpack.c.l.b16 %v147
    %v188 = vunpack.c.l.b16 %v148
    %v189 = vunpack.c.l.b16 %v149
    %v190 = vpack.c.b16 %v175, %v174
    %v191 = vpack.c.b16 %v177, %v176
    %v192 = vpack.c.b16 %v179, %v178
    %v193 = vpack.c.b16 %v181, %v180
    %v194 = vpack.c.b16 %v183, %v182
    %v195 = vpack.c.b16 %v185, %v184
    %v196 = vpack.c.b16 %v187, %v186
    %v197 = vpack.c.b16 %v189, %v188
    %206 = vmatprep.subr.bf16.mxu0 0
    %207 = vmatpush1.bf16.msra.mxu0 %v197
    %208 = vmatprep.subr.bf16.mxu0 0
    %209 = vmatpush1.bf16.msra.mxu0 %v196
    %210 = vmatprep.subr.bf16.mxu0 0
    %211 = vmatpush1.bf16.msra.mxu0 %v195
    %212 = vmatprep.subr.bf16.mxu0 0
    %213 = vmatpush1.bf16.msra.mxu0 %v194
    %214 = vmatprep.subr.bf16.mxu0 0
    %215 = vmatpush1.bf16.msra.mxu0 %v193
    %216 = vmatprep.subr.bf16.mxu0 0
    %217 = vmatpush1.bf16.msra.mxu0 %v192
    %218 = vmatprep.subr.bf16.mxu0 0
    %219 = vmatpush1.bf16.msra.mxu0 %v191
    %220 = vmatprep.subr.bf16.mxu0 0
    %221 = vmatpush1.bf16.msra.mxu0 %v190
    %222 = vmatprep.subr.bf16.mxu0 0
    %223 = vmatpush2.bf16.msra.mxu0 0
    %224 = vmatprep.subr.bf16.mxu0 0
    %225 = vmatpush2.bf16.msra.mxu0 0
    %226 = vmatprep.subr.bf16.mxu0 0
    %227 = vmatpush2.bf16.msra.mxu0 0
    %228 = vmatprep.subr.bf16.mxu0 0
    %229 = vmatpush2.bf16.msra.mxu0 0
    %230 = vmatprep.subr.bf16.mxu0 0
    %231 = vmatpush2.bf16.msra.mxu0 0
    %232 = vmatprep.subr.bf16.mxu0 0
    %233 = vmatpush2.bf16.msra.mxu0 0
    %234 = vmatprep.subr.bf16.mxu0 0
    %235 = vmatpush2.bf16.msra.mxu0 0
    %236 = vmatprep.subr.bf16.mxu0 0
    %237 = vmatpush2.bf16.msra.mxu0 0
    %238 = vmatprep.mubr.bf16.mxu0 0
    %239 = vmatmul.mubr.bf16.gmra.mxu0 %v150
    %v240 = vpop.f32.mrf.mxu0
    %v241 = vadd.f32 %v156, %v240
    %v242 = vpop.f32.mrf.mxu0
    %v243 = vpop.f32.mrf.mxu0
    %v244 = vadd.f32 %v156, %v243
    %v245 = vpop.f32.mrf.mxu0
    %246 = vdwg.mxu0
    %v247 = vpack.c.bf16 %v244, %v241
    %v249 = vunpack.c.l.b16 %v247
    %v250 = vunpack.c.h.b16 %v247
    %v251 = vpack.c.b16 %v249, %v249
    %v252 = vpack.c.b16 %v250, %v250
    %255 = vst [vmem:[#allocation5] sm:$0xf] %v251
    %256 = vst [vmem:[#allocation5 + $0x4] sm:$0xf] %v252
    // Predicated region
    $region26: #{tpu_custom_call.1} parent=1 // pred_check
      _
    $region27: #{tpu_custom_call.1} parent=1 // pred_check_branch
      %258 = sbr.rel (0) target = $region29
    $region28: #{tpu_custom_call.1} parent=1 // pred_region
      %s260 = ssub.s32 128, 128
      %261 = vsyncadd [#allocation4], %s260
      %s262 = sshll.u32 [#allocation5], 4
      %s263 = int_to_ptr.vmem [resolvable:$true] %s262
      %268 = dma.vmem_to_hbm [thread:$0]  %s263, 128, %s5, [#allocation4], 64, 64, 4
    $region29: #{tpu_custom_call.1} parent=1 // pred_fallthru
      _
    // Predicated region
    $region30: #{tpu_custom_call.1} parent=1 // pred_check
      _
    $region31: #{tpu_custom_call.1} parent=1 // pred_check_branch
      %270 = sbr.rel (0) target = $region33
    $region32: #{tpu_custom_call.1} parent=1 // pred_region
      %271 = dma.done [#allocation4], 128
    $region33: #{tpu_custom_call.1} parent=1 // pred_fallthru
      _
    %272 = vsyncpa [#allocation3], 1
    %273 = vsyncpa [#allocation4], 1

</llo_original>
